<compile_context>
chip_gen: v5e
topology: v5e:2x2
jax: 0.10.0
libtpu: 0.0.40
codegen_flags: <defaults>
</compile_context>

<pallas_src>
import functools

import jax
import jax.numpy as jnp
from jax import lax
from jax.experimental import pallas as pl
from jax.experimental.pallas import tpu as pltpu


def _round_up(x: int, m: int) -> int:
    return (x + m - 1) // m * m


def _vq_kernel(x_ref, cbt_ref, cb_ref, cbsq_ref,
               q_ref, loss_ref, idx_ref, counts_ref, *,
               commitment_loss: float, n_valid: int, k_pad: int,
               tile_n: int, ragged_tile: int):
    i = pl.program_id(0)

    x = x_ref[...]                                   # (tile_n, d), native dtype
    x_f32 = x.astype(jnp.float32)

    # Distances up to a per-row constant (argmin-invariant): |c|^2 - 2 x.c
    # bf16 operands + f32 accumulation -> single-pass MXU matmul.
    xc = lax.dot_general(x.astype(jnp.bfloat16), cbt_ref[...],
                         (((1,), (0,)), ((), ())),
                         preferred_element_type=jnp.float32)     # (tile_n, k_pad)
    dists = cbsq_ref[...] - 2.0 * xc                 # sentinel lanes carry +inf

    # First-occurrence argmin over centroids (matches torch.argmin).
    lane_iota = lax.broadcasted_iota(jnp.int32, dists.shape, 1)
    min_val = jnp.min(dists, axis=1, keepdims=True)              # (tile_n, 1)
    nn_idx = jnp.min(jnp.where(dists == min_val, lane_iota, k_pad),
                     axis=1, keepdims=True)                      # (tile_n, 1) int32

    # One-hot encodings; quantized = encodings @ codebook (codebook gather).
    enc_f32 = (lane_iota == nn_idx).astype(jnp.float32)          # (tile_n, k_pad)
    cb = cb_ref[...]                                             # (k_pad, d)
    quantized = jnp.dot(enc_f32.astype(cb.dtype), cb,
                        preferred_element_type=jnp.float32)      # (tile_n, d) f32

    # Quantization loss: forward value of square(q - x) (+ commitment * same).
    sq = (quantized - x_f32) ** 2
    loss = sq * (1.0 + commitment_loss) if commitment_loss > 0.0 else sq

    q_ref[...] = quantized.astype(q_ref.dtype)
    loss_ref[...] = loss.astype(loss_ref.dtype)

    # Lane-dense nn_idx slab (1, 1, tile_n).  The f32 round-trip is exact for
    # k < 2**24 and avoids relying on i32 XLU transpose lowering.
    idx_ref[...] = jnp.transpose(nn_idx.astype(jnp.float32))[None].astype(jnp.int32)

    # Per-tile partial cluster counts; invalid rows masked only on the ragged tile.
    if ragged_tile >= 0:
        @pl.when(i == ragged_tile)
        def _():
            row = lax.broadcasted_iota(jnp.int32, (tile_n, 1), 0) + i * tile_n
            masked = jnp.where(row < n_valid, enc_f32, 0.0)
            counts_ref[...] = jnp.sum(masked, axis=0, keepdims=True)[None]

        @pl.when(i != ragged_tile)
        def _():
            counts_ref[...] = jnp.sum(enc_f32, axis=0, keepdims=True)[None]
    else:
        counts_ref[...] = jnp.sum(enc_f32, axis=0, keepdims=True)[None]


def vector_quantizer_forward(inputs, codebook, *, train=True, ema_decay=0.99,
                             commitment_loss=0.0, cluster_counts=None, tile_n=None):
    """Forward pass of VectorQuantizer (demean=False, rescale=False).

    Returns (quantized, quantization_loss, nn_idx, codebook_values, [counts]).
    """
    # TODO(synk): demean / rescale EMA paths (feature_means / feature_stdev) are
    # not implemented; the module defaults demean=False, rescale=False are assumed.
    # TODO(synk): PyTorch's asymmetric stop-gradient commitment loss needs a
    # custom_vjp for training; only the forward value is reproduced here.
    # TODO(synk): very large codebooks (K*D*4 >> VMEM budget) would need a second
    # grid axis over K-chunks with an online running argmin; not implemented.
    # TODO(synk): pipeline_mode=pl.Buffered(1) on the grid-invariant codebook
    # inputs (v7x VMEM saving) is deliberately not set to keep the lowering
    # maximally portable; the VMEM budget below accounts for double-buffering.
    orig_shape = inputs.shape
    d = int(orig_shape[-1])
    k = int(codebook.shape[0])
    flat = inputs.reshape(-1, d)
    n = int(flat.shape[0])

    k_pad = _round_up(k, 128)
    out_dtype = inputs.dtype
    gather_dtype = jnp.bfloat16 if out_dtype == jnp.bfloat16 else jnp.float32

    # Grid-invariant small inputs, precomputed once (hoisted out of the kernel).
    cb_f32 = codebook.astype(jnp.float32)
    cb_sq = jnp.sum(cb_f32 * cb_f32, axis=1)                           # (k,)
    cb_sq = jnp.pad(cb_sq, (0, k_pad - k), constant_values=jnp.inf)[None, :]  # (1, k_pad)
    cb_t = jnp.pad(cb_f32, ((0, k_pad - k), (0, 0))).T.astype(jnp.bfloat16)   # (d, k_pad)
    cb_g = jnp.pad(codebook.astype(gather_dtype), ((0, k_pad - k), (0, 0)))   # (k_pad, d)

    # Generation-aware VMEM sizing (v5e/v6e: 128 MiB, v7x: 64 MiB per core).
    try:
        vmem_cap = int(pltpu.get_tpu_info().vmem_capacity_bytes)
    except Exception:  # pragma: no cover - conservative fallback
        vmem_cap = 64 * 1024 * 1024
    vmem_limit = min(int(vmem_cap * 0.80), 112 * 1024 * 1024)
    budget = min(int(vmem_cap * 0.40), 48 * 1024 * 1024)
    tile_cap = 2048 if vmem_cap >= 96 * 1024 * 1024 else 512

    in_bytes = jnp.dtype(inputs.dtype).itemsize
    out_bytes = jnp.dtype(out_dtype).itemsize
    gb = jnp.dtype(gather_dtype).itemsize

    n128 = _round_up(n, 128)
    if tile_n is None:
        # codebook-side VMEM (double-buffered even though grid-invariant) + outputs
        fixed = 2 * (d * k_pad * 2 + k_pad * d * gb + k_pad * 4) + k_pad * 8
        # x/q/loss HBM-facing blocks (x2 buffers) + f32 intermediates per row
        per_row = 2 * d * (in_bytes + 2 * out_bytes) + 3 * k_pad * 4 + 4 * d * 4 + 16
        avail = max(budget - fixed, per_row * 128)
        tile_n = (avail // per_row) // 128 * 128
        tile_n = int(max(128, min(tile_n, tile_cap, n128)))
        # Keep >= 2 grid steps whenever N permits so the "parallel" grid axis can
        # shard across v7x's two TensorCores (neutral on single-TC v5e/v6e).
        if n128 >= 256:
            tile_n = min(tile_n, _round_up(-(-n128 // 2), 128))
    assert tile_n % 128 == 0, "tile_n must be a multiple of 128 (lane-dense idx)"

    n_tiles = pl.cdiv(n, tile_n)
    ragged_tile = (n // tile_n) if (n % tile_n) else -1   # static

    kernel = functools.partial(
        _vq_kernel, commitment_loss=float(commitment_loss), n_valid=n,
        k_pad=k_pad, tile_n=tile_n, ragged_tile=ragged_tile)

    q_flat, loss_flat, idx_tiles, counts_tiles = pl.pallas_call(
        kernel,
        out_shape=(
            jax.ShapeDtypeStruct((n, d), out_dtype),                # quantized
            jax.ShapeDtypeStruct((n, d), out_dtype),                # quantization loss
            jax.ShapeDtypeStruct((n_tiles, 1, tile_n), jnp.int32),  # nn_idx (lane-dense)
            jax.ShapeDtypeStruct((n_tiles, 1, k_pad), jnp.float32), # per-tile counts
        ),
        grid_spec=pltpu.PrefetchScalarGridSpec(
            num_scalar_prefetch=0,
            grid=(n_tiles,),
            in_specs=[
                pl.BlockSpec((tile_n, d), lambda i: (i, 0)),     # flat inputs (native dtype)
                pl.BlockSpec((d, k_pad), lambda i: (0, 0)),      # codebook^T, bf16 (invariant)
                pl.BlockSpec((k_pad, d), lambda i: (0, 0)),      # codebook for gather (invariant)
                pl.BlockSpec((1, k_pad), lambda i: (0, 0)),      # |C|^2 (+inf sentinels)
            ],
            out_specs=[
                pl.BlockSpec((tile_n, d), lambda i: (i, 0)),
                pl.BlockSpec((tile_n, d), lambda i: (i, 0)),
                pl.BlockSpec((1, 1, tile_n), lambda i: (i, 0, 0)),
                pl.BlockSpec((1, 1, k_pad), lambda i: (i, 0, 0)),
            ],
        ),
        compiler_params=pltpu.CompilerParams(
            # No cross-step accumulator -> the N-tile axis shards across both
            # TensorCores on v7x (neutral on single-TC v5e/v6e).
            dimension_semantics=("parallel",),
            vmem_limit_bytes=int(vmem_limit),
        ),
    )(flat, cb_t, cb_g, cb_sq)

    # --- glue (plain JAX) ---
    if cluster_counts is None:
        cluster_counts = jnp.ones((k,), jnp.float32)
    batch_counts = jnp.sum(counts_tiles, axis=(0, 1))[:k]              # (K,)
    counts = jnp.where(
        train,
        ema_decay * cluster_counts + (1.0 - ema_decay) * batch_counts,
        cluster_counts,
    )

    quantized = q_flat.reshape(orig_shape)
    quantization_loss = loss_flat.reshape(orig_shape)
    nn_idx = idx_tiles.reshape(-1)[:n].reshape(orig_shape[:-1])[None, ...]  # unsqueeze(0)

    # straight-through estimator: quantized = inputs + sg(quantized - inputs)
    quantized = inputs + lax.stop_gradient(quantized.astype(inputs.dtype) - inputs)

    codebook_values = lax.stop_gradient(codebook)[None, ...]            # stop_gradient_codes=True
    return quantized, quantization_loss, nn_idx, codebook_values, [counts]


def _check(inputs, codebook, outs, ema_decay=0.99):
    """Tolerance-aware sanity check against a plain-JAX f32 reference."""
    quantized, qloss, nn_idx, cb_vals, (counts,) = outs
    d = inputs.shape[-1]
    k = codebook.shape[0]
    flat = inputs.reshape(-1, d).astype(jnp.float32)
    n = flat.shape[0]
    cb = codebook.astype(jnp.float32)
    dists = (jnp.sum(flat ** 2, axis=1, keepdims=True)
             - 2.0 * flat @ cb.T
             + jnp.sum(cb ** 2, axis=1)[None, :])

    assert quantized.shape == inputs.shape
    assert qloss.shape == inputs.shape
    assert nn_idx.shape == (1,) + inputs.shape[:-1]
    assert cb_vals.shape == (1, k, d)
    assert counts.shape == (k,)

    idx = nn_idx.reshape(-1)
    assert bool(jnp.all((idx >= 0) & (idx < k)))

    # Nearest-centroid check, tolerant to bf16 distance-matmul near-ties.
    rows = jnp.arange(n)
    chosen = dists[rows, idx]
    best = jnp.min(dists, axis=1)
    tol = 1e-2 * (1.0 + jnp.abs(best))
    assert bool(jnp.all(chosen <= best + tol)), float(jnp.max(chosen - best))

    # quantized rows are the selected codebook rows (up to MXU pass precision).
    gathered = cb[idx]
    assert jnp.allclose(quantized.reshape(-1, d), gathered, atol=5e-3), \
        float(jnp.max(jnp.abs(quantized.reshape(-1, d) - gathered)))
    # loss is self-consistent with the returned quantized values.
    assert jnp.allclose(qloss, (quantized.astype(jnp.float32) - inputs) ** 2, atol=1e-5)
    # cluster-count EMA is consistent with the kernel's own indices.
    bc = jnp.zeros((k,), jnp.float32).at[idx].add(1.0)
    assert jnp.allclose(counts, ema_decay * jnp.ones((k,)) + (1.0 - ema_decay) * bc,
                        atol=1e-4)


if __name__ == "__main__":
    key = jax.random.PRNGKey(0)
    k_in, k_cb, k_in2, k_cb2 = jax.random.split(key, 4)

    # --- config 1: channel-last (batch=2, seq=8, hidden=32), K=16 ---
    batch, seq, hidden, num_centroids = 2, 8, 32, 16
    inputs = jax.random.normal(k_in, (batch, seq, hidden), dtype=jnp.float32)
    # kaiming_normal_ on (num_centroids, hidden): std = sqrt(2 / fan_in)
    codebook = (jax.random.normal(k_cb, (num_centroids, hidden), dtype=jnp.float32)
                * jnp.sqrt(2.0 / hidden))
    outs = vector_quantizer_forward(inputs, codebook, train=True,
                                    ema_decay=0.99, commitment_loss=0.0)
    jax.block_until_ready(outs)
    _check(inputs, codebook, outs)

    # --- config 2: ragged multi-tile grid (batch=3, seq=50, hidden=48), K=20 ---
    inputs2 = jax.random.normal(k_in2, (3, 50, 48), dtype=jnp.float32)
    codebook2 = (jax.random.normal(k_cb2, (20, 48), dtype=jnp.float32)
                 * jnp.sqrt(2.0 / 48))
    outs2 = vector_quantizer_forward(inputs2, codebook2, train=True, tile_n=128)
    jax.block_until_ready(outs2)
    _check(inputs2, codebook2, outs2)

    print("KERNEL_OK")
</pallas_src>

<mosaic_0001>
module attributes {stable_mosaic.version = 11 : i64} {
  func.func @_vq_kernel(%arg0: i32, %arg1: memref<128x32xf32, #tpu.memory_space<vmem>>, %arg2: memref<32x128xbf16, #tpu.memory_space<vmem>>, %arg3: memref<128x32xf32, #tpu.memory_space<vmem>>, %arg4: memref<1x128xf32, #tpu.memory_space<vmem>>, %arg5: memref<128x32xf32, #tpu.memory_space<vmem>>, %arg6: memref<128x32xf32, #tpu.memory_space<vmem>>, %arg7: memref<1x1x128xi32, #tpu.memory_space<vmem>>, %arg8: memref<1x1x128xf32, #tpu.memory_space<vmem>>) attributes {dimension_semantics = [#tpu.dimension_semantics<parallel>], iteration_bounds = array<i64: 1>, scalar_prefetch = 0 : i64, scratch_operands = 0 : i64, tpu.core_type = #tpu.core_type<tc>, window_params = [{transform_indices = @transform_0, window_bounds = array<i64: 128, 32>}, {pipeline_mode = #tpu.pipeline_mode<synchronous>, transform_indices = @transform_1, window_bounds = array<i64: 32, 128>}, {pipeline_mode = #tpu.pipeline_mode<synchronous>, transform_indices = @transform_2, window_bounds = array<i64: 128, 32>}, {pipeline_mode = #tpu.pipeline_mode<synchronous>, transform_indices = @transform_3, window_bounds = array<i64: 1, 128>}, {transform_indices = @transform_4, window_bounds = array<i64: 128, 32>}, {transform_indices = @transform_5, window_bounds = array<i64: 128, 32>}, {transform_indices = @transform_6, window_bounds = array<i64: 1, 1, 128>}, {transform_indices = @transform_7, window_bounds = array<i64: 1, 1, 128>}]} {
    %c0 = arith.constant 0 : index
    %c0_0 = arith.constant 0 : index
    %0 = vector.load %arg1[%c0, %c0_0] : memref<128x32xf32, #tpu.memory_space<vmem>>, vector<128x32xf32>
    %1 = arith.truncf %0 : vector<128x32xf32> to vector<128x32xbf16>
    %c0_1 = arith.constant 0 : index
    %c0_2 = arith.constant 0 : index
    %2 = vector.load %arg2[%c0_1, %c0_2] : memref<32x128xbf16, #tpu.memory_space<vmem>>, vector<32x128xbf16>
    %cst = arith.constant dense<0.000000e+00> : vector<128x128xf32>
    %3 = tpu.matmul %1, %2, %cst {dimension_numbers = #tpu.dot_dimension_numbers<[1], [0], [0], [1], [0, 0, 1, 1], [], []>} : vector<128x32xbf16>, vector<32x128xbf16>, vector<128x128xf32> -> vector<128x128xf32>
    %c0_3 = arith.constant 0 : index
    %c0_4 = arith.constant 0 : index
    %4 = vector.load %arg4[%c0_3, %c0_4] : memref<1x128xf32, #tpu.memory_space<vmem>>, vector<1x128xf32>
    %cst_5 = arith.constant 2.000000e+00 : f32
    %5 = vector.broadcast %cst_5 : f32 to vector<128x128xf32>
    %6 = arith.mulf %5, %3 : vector<128x128xf32>
    %7 = vector.broadcast %4 : vector<1x128xf32> to vector<128x128xf32>
    %8 = arith.subf %7, %6 : vector<128x128xf32>
    %9 = tpu.iota {dimensions = array<i32: 1>} : vector<128x128xi32>
    %cst_6 = arith.constant dense<0x7F800000> : vector<128xf32>
    %10 = vector.multi_reduction <minimumf>, %8, %cst_6 [1] : vector<128x128xf32> to vector<128xf32>
    %11 = vector.shape_cast %10 : vector<128xf32> to vector<128x1xf32>
    %12 = vector.broadcast %11 : vector<128x1xf32> to vector<128x128xf32>
    %13 = arith.cmpf oeq, %8, %12 : vector<128x128xf32>
    %c128_i32 = arith.constant 128 : i32
    %14 = vector.broadcast %c128_i32 : i32 to vector<128x128xi32>
    %15 = arith.select %13, %9, %14 : vector<128x128xi1>, vector<128x128xi32>
    %cst_7 = arith.constant dense<2147483647> : vector<128xi32>
    %16 = vector.multi_reduction <minsi>, %15, %cst_7 [1] : vector<128x128xi32> to vector<128xi32>
    %17 = vector.shape_cast %16 : vector<128xi32> to vector<128x1xi32>
    %18 = vector.broadcast %17 : vector<128x1xi32> to vector<128x128xi32>
    %19 = arith.cmpi eq, %9, %18 : vector<128x128xi32>
    %20 = arith.extui %19 : vector<128x128xi1> to vector<128x128xi32>
    %21 = arith.sitofp %20 : vector<128x128xi32> to vector<128x128xf32>
    %c0_8 = arith.constant 0 : index
    %c0_9 = arith.constant 0 : index
    %22 = vector.load %arg3[%c0_8, %c0_9] : memref<128x32xf32, #tpu.memory_space<vmem>>, vector<128x32xf32>
    %cst_10 = arith.constant dense<0.000000e+00> : vector<128x32xf32>
    %23 = tpu.matmul %21, %22, %cst_10 {dimension_numbers = #tpu.dot_dimension_numbers<[1], [0], [0], [1], [0, 0, 1, 1], [], []>} : vector<128x128xf32>, vector<128x32xf32>, vector<128x32xf32> -> vector<128x32xf32>
    %24 = arith.subf %23, %0 : vector<128x32xf32>
    %25 = arith.mulf %24, %24 : vector<128x32xf32>
    %c0_11 = arith.constant 0 : index
    %c0_12 = arith.constant 0 : index
    %26 = vector.load %arg5[%c0_11, %c0_12] : memref<128x32xf32, #tpu.memory_space<vmem>>, vector<128x32xf32>
    tpu.vector_store %arg5[%c0_11, %c0_12], %23 {strides = array<i32>} : memref<128x32xf32, #tpu.memory_space<vmem>>, vector<128x32xf32>,
    %c0_13 = arith.constant 0 : index
    %c0_14 = arith.constant 0 : index
    %27 = vector.load %arg6[%c0_13, %c0_14] : memref<128x32xf32, #tpu.memory_space<vmem>>, vector<128x32xf32>
    tpu.vector_store %arg6[%c0_13, %c0_14], %25 {strides = array<i32>} : memref<128x32xf32, #tpu.memory_space<vmem>>, vector<128x32xf32>,
    %28 = arith.sitofp %17 : vector<128x1xi32> to vector<128x1xf32>
    %29 = tpu.transpose %28, [1, 0] : vector<128x1xf32> -> vector<1x128xf32>
    %30 = vector.shape_cast %29 : vector<1x128xf32> to vector<1x1x128xf32>
    %31 = arith.fptosi %30 : vector<1x1x128xf32> to vector<1x1x128xi32>
    %c0_15 = arith.constant 0 : index
    %c0_16 = arith.constant 0 : index
    %c0_17 = arith.constant 0 : index
    %32 = vector.load %arg7[%c0_15, %c0_16, %c0_17] : memref<1x1x128xi32, #tpu.memory_space<vmem>>, vector<1x1x128xi32>
    tpu.vector_store %arg7[%c0_15, %c0_16, %c0_17], %31 {strides = array<i32>} : memref<1x1x128xi32, #tpu.memory_space<vmem>>, vector<1x1x128xi32>,
    %c0_i32 = arith.constant 0 : i32
    %33 = arith.cmpi eq, %arg0, %c0_i32 : i32
    %34 = arith.extui %33 : i1 to i32
    %c0_i32_18 = arith.constant 0 : i32
    %35 = arith.cmpi ne, %34, %c0_i32_18 : i32
    scf.if %35 {
      %39 = tpu.iota {dimensions = array<i32: 0>} : vector<128x1xi32>
      %c128_i32_21 = arith.constant 128 : i32
      %40 = arith.muli %arg0, %c128_i32_21 : i32
      %41 = vector.broadcast %40 : i32 to vector<128x1xi32>
      %42 = arith.addi %39, %41 : vector<128x1xi32>
      %c16_i32 = arith.constant 16 : i32
      %43 = vector.broadcast %c16_i32 : i32 to vector<128x1xi32>
      %44 = arith.cmpi slt, %42, %43 : vector<128x1xi32>
      %cst_22 = arith.constant 0.000000e+00 : f32
      %45 = vector.shape_cast %44 : vector<128x1xi1> to vector<128x1xi1>
      %46 = vector.broadcast %45 : vector<128x1xi1> to vector<128x128xi1>
      %47 = vector.broadcast %cst_22 : f32 to vector<128x128xf32>
      %48 = arith.select %46, %21, %47 : vector<128x128xi1>, vector<128x128xf32>
      %cst_23 = arith.constant dense<0.000000e+00> : vector<128xf32>
      %49 = vector.multi_reduction <add>, %48, %cst_23 [0] : vector<128x128xf32> to vector<128xf32>
      %50 = vector.shape_cast %49 : vector<128xf32> to vector<1x128xf32>
      %51 = vector.shape_cast %50 : vector<1x128xf32> to vector<1x1x128xf32>
      %c0_24 = arith.constant 0 : index
      %c0_25 = arith.constant 0 : index
      %c0_26 = arith.constant 0 : index
      %52 = vector.load %arg8[%c0_24, %c0_25, %c0_26] : memref<1x1x128xf32, #tpu.memory_space<vmem>>, vector<1x1x128xf32>
      tpu.vector_store %arg8[%c0_24, %c0_25, %c0_26], %51 {strides = array<i32>} : memref<1x1x128xf32, #tpu.memory_space<vmem>>, vector<1x1x128xf32>,
    } else {
    }
    %c0_i32_19 = arith.constant 0 : i32
    %36 = arith.cmpi ne, %arg0, %c0_i32_19 : i32
    %37 = arith.extui %36 : i1 to i32
    %c0_i32_20 = arith.constant 0 : i32
    %38 = arith.cmpi ne, %37, %c0_i32_20 : i32
    scf.if %38 {
      %cst_21 = arith.constant dense<0.000000e+00> : vector<128xf32>
      %39 = vector.multi_reduction <add>, %21, %cst_21 [0] : vector<128x128xf32> to vector<128xf32>
      %40 = vector.shape_cast %39 : vector<128xf32> to vector<1x128xf32>
      %41 = vector.shape_cast %40 : vector<1x128xf32> to vector<1x1x128xf32>
      %c0_22 = arith.constant 0 : index
      %c0_23 = arith.constant 0 : index
      %c0_24 = arith.constant 0 : index
      %42 = vector.load %arg8[%c0_22, %c0_23, %c0_24] : memref<1x1x128xf32, #tpu.memory_space<vmem>>, vector<1x1x128xf32>
      tpu.vector_store %arg8[%c0_22, %c0_23, %c0_24], %41 {strides = array<i32>} : memref<1x1x128xf32, #tpu.memory_space<vmem>>, vector<1x1x128xf32>,
    } else {
    }
    return
  }
  func.func @transform_0(%arg0: i32) -> (i32, i32) {
    %c0_i32 = arith.constant 0 : i32
    %c0_i32_0 = arith.constant 0 : i32
    return %arg0, %c0_i32 : i32, i32
  }
  func.func @transform_1(%arg0: i32) -> (i32, i32) {
    %c0_i32 = arith.constant 0 : i32
    %c0_i32_0 = arith.constant 0 : i32
    %c0_i32_1 = arith.constant 0 : i32
    return %c0_i32, %c0_i32_0 : i32, i32
  }
  func.func @transform_2(%arg0: i32) -> (i32, i32) {
    %c0_i32 = arith.constant 0 : i32
    %c0_i32_0 = arith.constant 0 : i32
    %c0_i32_1 = arith.constant 0 : i32
    return %c0_i32, %c0_i32_0 : i32, i32
  }
  func.func @transform_3(%arg0: i32) -> (i32, i32) {
    %c0_i32 = arith.constant 0 : i32
    %c0_i32_0 = arith.constant 0 : i32
    %c0_i32_1 = arith.constant 0 : i32
    return %c0_i32, %c0_i32_0 : i32, i32
  }
  func.func @transform_4(%arg0: i32) -> (i32, i32) {
    %c0_i32 = arith.constant 0 : i32
    %c0_i32_0 = arith.constant 0 : i32
    return %arg0, %c0_i32 : i32, i32
  }
  func.func @transform_5(%arg0: i32) -> (i32, i32) {
    %c0_i32 = arith.constant 0 : i32
    %c0_i32_0 = arith.constant 0 : i32
    return %arg0, %c0_i32 : i32, i32
  }
  func.func @transform_6(%arg0: i32) -> (i32, i32, i32) {
    %c0_i32 = arith.constant 0 : i32
    %c0_i32_0 = arith.constant 0 : i32
    %c0_i32_1 = arith.constant 0 : i32
    return %arg0, %c0_i32, %c0_i32_0 : i32, i32, i32
  }
  func.func @transform_7(%arg0: i32) -> (i32, i32, i32) {
    %c0_i32 = arith.constant 0 : i32
    %c0_i32_0 = arith.constant 0 : i32
    %c0_i32_1 = arith.constant 0 : i32
    return %arg0, %c0_i32, %c0_i32_0 : i32, i32, i32
  }
}

</mosaic_0001>

<llo_original>
// kernel: tpu_custom_call.1
$region0: #{tpu_custom_call.1}
  #allocation0 [shape = 'u32[]', space=smem, size = 0x4, offset = 0x4, fixed_abs, tag = 'smem constant byte address 0x4 - core index']
  #allocation1 [shape = 'u32[72,128]{1,0:T(1,128)}', space=vmem, size = 0x9000, scoped, tag = 'internal scratch']
  %s0 = inlined_call_operand.vmem [shape: f32[16,32], index: 0, kind: input, shape index: {}]
  %s1 = inlined_call_operand.vmem [shape: bf16[32,128], index: 1, kind: input, shape index: {}]
  %s2 = inlined_call_operand.vmem [shape: f32[128,32], index: 2, kind: input, shape index: {}]
  %s3 = inlined_call_operand.vmem [shape: f32[1,128], index: 3, kind: input, shape index: {}]
  %s4 = inlined_call_operand.hbm [shape: f32[16,32], index: 4, kind: output, shape index: {0}]
  %s5 = inlined_call_operand.hbm [shape: f32[16,32], index: 5, kind: output, shape index: {1}]
  %s6 = inlined_call_operand.hbm [shape: s32[1,1,128], index: 6, kind: output, shape index: {2}]
  %s7 = inlined_call_operand.hbm [shape: f32[1,1,128], index: 7, kind: output, shape index: {3}]
  %8 = xla_tuple %s4, %s5, %s6, %s7
  %s9 = sld [smem:[#allocation0]]
  $region58: #{tpu_custom_call.1} parent=0
    _
  %s11 = ssub.s32 1, %s9
  %s12 = scalar_select 0, %s11, %s9
  $region1: #{tpu_custom_call.1} parent=0
    #allocation2 [shape = 'u8[65536]{0}', space=vmem, size = 0x10000, scoped, tag = 'output window, operand 0, single buffered']
    #allocation3 [shape = 's32[1]{0}', space=sflag, size = 0x4, scoped, tag = 'scoped memory for tpu_custom_call.1']
    #allocation4 [shape = 'u8[65536]{0}', space=vmem, size = 0x10000, scoped, tag = 'output window, operand 1, single buffered']
    #allocation5 [shape = 's32[1]{0}', space=sflag, size = 0x4, scoped, tag = 'scoped memory for tpu_custom_call.1']
    #allocation6 [shape = 'u8[512]{0}', space=vmem, size = 0x400, scoped, tag = 'output window, operand 2, single buffered']
    #allocation7 [shape = 'u8[512]{0}', space=vmem, size = 0x400, scoped, tag = 'output window, operand 3, single buffered']
    #allocation8 [shape = 's32[1]{0}', space=sflag, size = 0x4, scoped, tag = 'scoped memory for tpu_custom_call.1']
    %13 = vsyncpa [#allocation3], 0
    %14 = vsyncpa [#allocation5], 0
    %15 = vsyncpa [#allocation8], 0
    // Predicated region
    $region2: #{tpu_custom_call.1} parent=1 // pred_check
      _
    $region3: #{tpu_custom_call.1} parent=1 // pred_check_branch
      %17 = sbr.rel (0) target = $region5
    $region4: #{tpu_custom_call.1} parent=1 // pred_region
      _
    $region5: #{tpu_custom_call.1} parent=1 // pred_fallthru
      _
    // Predicated region
    $region6: #{tpu_custom_call.1} parent=1 // pred_check
      _
    $region7: #{tpu_custom_call.1} parent=1 // pred_check_branch
      %19 = sbr.rel (0) target = $region9
    $region8: #{tpu_custom_call.1} parent=1 // pred_region
      _
    $region9: #{tpu_custom_call.1} parent=1 // pred_fallthru
      _
    // Predicated region
    $region10: #{tpu_custom_call.1} parent=1 // pred_check
      _
    $region11: #{tpu_custom_call.1} parent=1 // pred_check_branch
      %21 = sbr.rel (0) target = $region13
    $region12: #{tpu_custom_call.1} parent=1 // pred_region
      _
    $region13: #{tpu_custom_call.1} parent=1 // pred_fallthru
      _
    // Predicated region
    $region14: #{tpu_custom_call.1} parent=1 // pred_check
      _
    $region15: #{tpu_custom_call.1} parent=1 // pred_check_branch
      %23 = sbr.rel (0) target = $region17
    $region16: #{tpu_custom_call.1} parent=1 // pred_region
      _
    $region17: #{tpu_custom_call.1} parent=1 // pred_fallthru
      _
    %v25 = vld [vmem:[%s0] sm:$0xff]
    %v26 = vld [vmem:[%s0 + $0x8] sm:$0xff]
    %v27 = vld [vmem:[%s0 + $0x10] sm:$0xff]
    %v28 = vld [vmem:[%s0 + $0x18] sm:$0xff]
    %v29 = vld [vmem:[%s0 + $0x20] sm:$0xff]
    %v30 = vld [vmem:[%s0 + $0x28] sm:$0xff]
    %v31 = vld [vmem:[%s0 + $0x30] sm:$0xff]
    %v32 = vld [vmem:[%s0 + $0x38] sm:$0xff]
    %v33 = vld [vmem:[%s0 + $0x40] sm:$0xff]
    %v34 = vld [vmem:[%s0 + $0x48] sm:$0xff]
    %v35 = vld [vmem:[%s0 + $0x50] sm:$0xff]
    %v36 = vld [vmem:[%s0 + $0x58] sm:$0xff]
    %v37 = vld [vmem:[%s0 + $0x60] sm:$0xff]
    %v38 = vld [vmem:[%s0 + $0x68] sm:$0xff]
    %v39 = vld [vmem:[%s0 + $0x70] sm:$0xff]
    %v40 = vld [vmem:[%s0 + $0x78] sm:$0xff]
    %v41 = vpack.c.bf16 %v26, %v25
    %v42 = vpack.c.bf16 %v28, %v27
    %v43 = vpack.c.bf16 %v30, %v29
    %v44 = vpack.c.bf16 %v32, %v31
    %v45 = vpack.c.bf16 %v34, %v33
    %v46 = vpack.c.bf16 %v36, %v35
    %v47 = vpack.c.bf16 %v38, %v37
    %v48 = vpack.c.bf16 %v40, %v39
    %v49 = vld [vmem:[%s1] sm:$0xf]
    %v50 = vld [vmem:[%s1 + $0x4] sm:$0xf]
    %v51 = vld [vmem:[%s1 + $0x8] sm:$0xf]
    %v52 = vld [vmem:[%s1 + $0xc] sm:$0xf]
    %v57 = vunpack.c.l.b16 %v49
    %v58 = vunpack.c.l.b16 %v50
    %v59 = vunpack.c.l.b16 %v51
    %v60 = vunpack.c.l.b16 %v52
    %v61 = vpack.c.b16 %v58, %v57
    %v62 = vpack.c.b16 %v60, %v59
    %vm65 = vcmask 261120
    %v67 = vsel %vm65, %v41, 0
    %v70 = vsel %vm65, %v42, 0
    %v73 = vsel %vm65, %v43, 0
    %v76 = vsel %vm65, %v44, 0
    %v79 = vsel %vm65, %v45, 0
    %v82 = vsel %vm65, %v46, 0
    %v85 = vsel %vm65, %v47, 0
    %v88 = vsel %vm65, %v48, 0
    %90 = vmatpush.bf16.msra.mxu0 0
    %91 = vmatpush.bf16.msra.mxu0 0
    %92 = vmatpush.bf16.msra.mxu0 0
    %93 = vmatpush.bf16.msra.mxu0 0
    %94 = vmatpush.bf16.msra.mxu0 0
    %95 = vmatpush.bf16.msra.mxu0 0
    %96 = vmatpush.bf16.msra.mxu0 %v62
    %97 = vmatpush.bf16.msra.mxu0 %v61
    %98 = vmatmul.bf16.gmra.mxu0 %v67
    %v99 = vpop.f32.mrf.mxu0
    %v100 = vadd.f32 0.0, %v99
    %v101 = vpop.f32.mrf.mxu0
    %v102 = vadd.f32 0.0, %v101
    %103 = vmatmul.bf16.gmra.mxu0 %v70
    %v104 = vpop.f32.mrf.mxu0
    %v105 = vadd.f32 0.0, %v104
    %v106 = vpop.f32.mrf.mxu0
    %v107 = vadd.f32 0.0, %v106
    %108 = vmatmul.bf16.gmra.mxu0 %v73
    %v109 = vpop.f32.mrf.mxu0
    %v110 = vadd.f32 0.0, %v109
    %v111 = vpop.f32.mrf.mxu0
    %v112 = vadd.f32 0.0, %v111
    %113 = vmatmul.bf16.gmra.mxu0 %v76
    %v114 = vpop.f32.mrf.mxu0
    %v115 = vadd.f32 0.0, %v114
    %v116 = vpop.f32.mrf.mxu0
    %v117 = vadd.f32 0.0, %v116
    %118 = vmatmul.bf16.gmra.mxu0 %v79
    %v119 = vpop.f32.mrf.mxu0
    %v120 = vadd.f32 0.0, %v119
    %v121 = vpop.f32.mrf.mxu0
    %v122 = vadd.f32 0.0, %v121
    %123 = vmatmul.bf16.gmra.mxu0 %v82
    %v124 = vpop.f32.mrf.mxu0
    %v125 = vadd.f32 0.0, %v124
    %v126 = vpop.f32.mrf.mxu0
    %v127 = vadd.f32 0.0, %v126
    %128 = vmatmul.bf16.gmra.mxu0 %v85
    %v129 = vpop.f32.mrf.mxu0
    %v130 = vadd.f32 0.0, %v129
    %v131 = vpop.f32.mrf.mxu0
    %v132 = vadd.f32 0.0, %v131
    %133 = vmatmul.bf16.gmra.mxu0 %v88
    %v134 = vpop.f32.mrf.mxu0
    %v135 = vadd.f32 0.0, %v134
    %v136 = vpop.f32.mrf.mxu0
    %v137 = vadd.f32 0.0, %v136
    %138 = vdwg.mxu0
    %v139 = vld [vmem:[%s3] sm:$0x1]
    %v140 = vmul.f32 %v100, 2.0
    %v141 = vmul.f32 %v102, 2.0
    %v142 = vmul.f32 %v105, 2.0
    %v143 = vmul.f32 %v107, 2.0
    %v144 = vmul.f32 %v110, 2.0
    %v145 = vmul.f32 %v112, 2.0
    %v146 = vmul.f32 %v115, 2.0
    %v147 = vmul.f32 %v117, 2.0
    %v148 = vmul.f32 %v120, 2.0
    %v149 = vmul.f32 %v122, 2.0
    %v150 = vmul.f32 %v125, 2.0
    %v151 = vmul.f32 %v127, 2.0
    %v152 = vmul.f32 %v130, 2.0
    %v153 = vmul.f32 %v132, 2.0
    %v154 = vmul.f32 %v135, 2.0
    %v155 = vmul.f32 %v137, 2.0
    %v157 = vperm.slane %v139, 0
    %v159 = vsub.f32 %v157, %v140
    %v160 = vsub.f32 %v157, %v141
    %v161 = vsub.f32 %v157, %v142
    %v162 = vsub.f32 %v157, %v143
    %v163 = vsub.f32 %v157, %v144
    %v164 = vsub.f32 %v157, %v145
    %v165 = vsub.f32 %v157, %v146
    %v166 = vsub.f32 %v157, %v147
    %v167 = vsub.f32 %v157, %v148
    %v168 = vsub.f32 %v157, %v149
    %v169 = vsub.f32 %v157, %v150
    %v170 = vsub.f32 %v157, %v151
    %v171 = vsub.f32 %v157, %v152
    %v172 = vsub.f32 %v157, %v153
    %v173 = vsub.f32 %v157, %v154
    %v174 = vsub.f32 %v157, %v155
    %v175 = vlaneseq
    %v176 = vand.u32 %v175, 127
    %177 = vmin.xlane.f32.xlu0 %v159
    %v178 = vpop.xlane.xlu0 %177
    %179 = vmin.xlane.f32.xlu0 %v160
    %v180 = vpop.xlane.xlu0 %179
    %181 = vmin.xlane.f32.xlu0 %v161
    %v182 = vpop.xlane.xlu0 %181
    %183 = vmin.xlane.f32.xlu0 %v162
    %v184 = vpop.xlane.xlu0 %183
    %185 = vmin.xlane.f32.xlu0 %v163
    %v186 = vpop.xlane.xlu0 %185
    %187 = vmin.xlane.f32.xlu0 %v164
    %v188 = vpop.xlane.xlu0 %187
    %189 = vmin.xlane.f32.xlu0 %v165
    %v190 = vpop.xlane.xlu0 %189
    %191 = vmin.xlane.f32.xlu0 %v166
    %v192 = vpop.xlane.xlu0 %191
    %193 = vmin.xlane.f32.xlu0 %v167
    %v194 = vpop.xlane.xlu0 %193
    %195 = vmin.xlane.f32.xlu0 %v168
    %v196 = vpop.xlane.xlu0 %195
    %197 = vmin.xlane.f32.xlu0 %v169
    %v198 = vpop.xlane.xlu0 %197
    %199 = vmin.xlane.f32.xlu0 %v170
    %v200 = vpop.xlane.xlu0 %199
    %201 = vmin.xlane.f32.xlu0 %v171
    %v202 = vpop.xlane.xlu0 %201
    %203 = vmin.xlane.f32.xlu0 %v172
    %v204 = vpop.xlane.xlu0 %203
    %205 = vmin.xlane.f32.xlu0 %v173
    %v206 = vpop.xlane.xlu0 %205
    %207 = vmin.xlane.f32.xlu0 %v174
    %v208 = vpop.xlane.xlu0 %207
    %vm209 = vcmp.eq.f32.partialorder %v159, %v178
    %vm210 = vcmp.eq.f32.partialorder %v160, %v180
    %vm211 = vcmp.eq.f32.partialorder %v161, %v182
    %vm212 = vcmp.eq.f32.partialorder %v162, %v184
    %vm213 = vcmp.eq.f32.partialorder %v163, %v186
    %vm214 = vcmp.eq.f32.partialorder %v164, %v188
    %vm215 = vcmp.eq.f32.partialorder %v165, %v190
    %vm216 = vcmp.eq.f32.partialorder %v166, %v192
    %vm217 = vcmp.eq.f32.partialorder %v167, %v194
    %vm218 = vcmp.eq.f32.partialorder %v168, %v196
    %vm219 = vcmp.eq.f32.partialorder %v169, %v198
    %vm220 = vcmp.eq.f32.partialorder %v170, %v200
    %vm221 = vcmp.eq.f32.partialorder %v171, %v202
    %vm222 = vcmp.eq.f32.partialorder %v172, %v204
    %vm223 = vcmp.eq.f32.partialorder %v173, %v206
    %vm224 = vcmp.eq.f32.partialorder %v174, %v208
    %v225 = vsel %vm209, %v176, 128
    %v226 = vsel %vm210, %v176, 128
    %v227 = vsel %vm211, %v176, 128
    %v228 = vsel %vm212, %v176, 128
    %v229 = vsel %vm213, %v176, 128
    %v230 = vsel %vm214, %v176, 128
    %v231 = vsel %vm215, %v176, 128
    %v232 = vsel %vm216, %v176, 128
    %v233 = vsel %vm217, %v176, 128
    %v234 = vsel %vm218, %v176, 128
    %v235 = vsel %vm219, %v176, 128
    %v236 = vsel %vm220, %v176, 128
    %v237 = vsel %vm221, %v176, 128
    %v238 = vsel %vm222, %v176, 128
    %v239 = vsel %vm223, %v176, 128
    %v240 = vsel %vm224, %v176, 128
    %v241 = vand.u32 %v225, 65535
    %v242 = vshra.s32 %v225, 16
    %v243 = vcvt.s32.f32 %v241
    %v244 = vcvt.s32.f32 %v242
    %245 = vmin.xlane.f32.xlu0 %v244
    %v246 = vpop.xlane.xlu0 %245
    %vm247 = vcmp.eq.f32.partialorder %v244, %v246
    %v248 = vsel %vm247, %v243, inf
    %249 = vmin.xlane.f32.xlu0 %v248
    %v250 = vpop.xlane.xlu0 %249
    %v251 = vcvt.f32.s32 %v250
    %v252 = vcvt.f32.s32 %v246
    %v253 = vshll.u32 %v252, 16
    %v254 = vadd.s32 %v253, %v251
    %v255 = vand.u32 %v226, 65535
    %v256 = vshra.s32 %v226, 16
    %v257 = vcvt.s32.f32 %v255
    %v258 = vcvt.s32.f32 %v256
    %259 = vmin.xlane.f32.xlu0 %v258
    %v260 = vpop.xlane.xlu0 %259
    %vm261 = vcmp.eq.f32.partialorder %v258, %v260
    %v262 = vsel %vm261, %v257, inf
    %263 = vmin.xlane.f32.xlu0 %v262
    %v264 = vpop.xlane.xlu0 %263
    %v265 = vcvt.f32.s32 %v264
    %v266 = vcvt.f32.s32 %v260
    %v267 = vshll.u32 %v266, 16
    %v268 = vadd.s32 %v267, %v265
    %v269 = vand.u32 %v227, 65535
    %v270 = vshra.s32 %v227, 16
    %v271 = vcvt.s32.f32 %v269
    %v272 = vcvt.s32.f32 %v270
    %273 = vmin.xlane.f32.xlu0 %v272
    %v274 = vpop.xlane.xlu0 %273
    %vm275 = vcmp.eq.f32.partialorder %v272, %v274
    %v276 = vsel %vm275, %v271, inf
    %277 = vmin.xlane.f32.xlu0 %v276
    %v278 = vpop.xlane.xlu0 %277
    %v279 = vcvt.f32.s32 %v278
    %v280 = vcvt.f32.s32 %v274
    %v281 = vshll.u32 %v280, 16
    %v282 = vadd.s32 %v281, %v279
    %v283 = vand.u32 %v228, 65535
    %v284 = vshra.s32 %v228, 16
    %v285 = vcvt.s32.f32 %v283
    %v286 = vcvt.s32.f32 %v284
    %287 = vmin.xlane.f32.xlu0 %v286
    %v288 = vpop.xlane.xlu0 %287
    %vm289 = vcmp.eq.f32.partialorder %v286, %v288
    %v290 = vsel %vm289, %v285, inf
    %291 = vmin.xlane.f32.xlu0 %v290
    %v292 = vpop.xlane.xlu0 %291
    %v293 = vcvt.f32.s32 %v292
    %v294 = vcvt.f32.s32 %v288
    %v295 = vshll.u32 %v294, 16
    %v296 = vadd.s32 %v295, %v293
    %v297 = vand.u32 %v229, 65535
    %v298 = vshra.s32 %v229, 16
    %v299 = vcvt.s32.f32 %v297
    %v300 = vcvt.s32.f32 %v298
    %301 = vmin.xlane.f32.xlu0 %v300
    %v302 = vpop.xlane.xlu0 %301
    %vm303 = vcmp.eq.f32.partialorder %v300, %v302
    %v304 = vsel %vm303, %v299, inf
    %305 = vmin.xlane.f32.xlu0 %v304
    %v306 = vpop.xlane.xlu0 %305
    %v307 = vcvt.f32.s32 %v306
    %v308 = vcvt.f32.s32 %v302
    %v309 = vshll.u32 %v308, 16
    %v310 = vadd.s32 %v309, %v307
    %v311 = vand.u32 %v230, 65535
    %v312 = vshra.s32 %v230, 16
    %v313 = vcvt.s32.f32 %v311
    %v314 = vcvt.s32.f32 %v312
    %315 = vmin.xlane.f32.xlu0 %v314
    %v316 = vpop.xlane.xlu0 %315
    %vm317 = vcmp.eq.f32.partialorder %v314, %v316
    %v318 = vsel %vm317, %v313, inf
    %319 = vmin.xlane.f32.xlu0 %v318
    %v320 = vpop.xlane.xlu0 %319
    %v321 = vcvt.f32.s32 %v320
    %v322 = vcvt.f32.s32 %v316
    %v323 = vshll.u32 %v322, 16
    %v324 = vadd.s32 %v323, %v321
    %v325 = vand.u32 %v231, 65535
    %v326 = vshra.s32 %v231, 16
    %v327 = vcvt.s32.f32 %v325
    %v328 = vcvt.s32.f32 %v326
    %329 = vmin.xlane.f32.xlu0 %v328
    %v330 = vpop.xlane.xlu0 %329
    %vm331 = vcmp.eq.f32.partialorder %v328, %v330
    %v332 = vsel %vm331, %v327, inf
    %333 = vmin.xlane.f32.xlu0 %v332
    %v334 = vpop.xlane.xlu0 %333
    %v335 = vcvt.f32.s32 %v334
    %v336 = vcvt.f32.s32 %v330
    %v337 = vshll.u32 %v336, 16
    %v338 = vadd.s32 %v337, %v335
    %v339 = vand.u32 %v232, 65535
    %v340 = vshra.s32 %v232, 16
    %v341 = vcvt.s32.f32 %v339
    %v342 = vcvt.s32.f32 %v340
    %343 = vmin.xlane.f32.xlu0 %v342
    %v344 = vpop.xlane.xlu0 %343
    %vm345 = vcmp.eq.f32.partialorder %v342, %v344
    %v346 = vsel %vm345, %v341, inf
    %347 = vmin.xlane.f32.xlu0 %v346
    %v348 = vpop.xlane.xlu0 %347
    %v349 = vcvt.f32.s32 %v348
    %v350 = vcvt.f32.s32 %v344
    %v351 = vshll.u32 %v350, 16
    %v352 = vadd.s32 %v351, %v349
    %v353 = vand.u32 %v233, 65535
    %v354 = vshra.s32 %v233, 16
    %v355 = vcvt.s32.f32 %v353
    %v356 = vcvt.s32.f32 %v354
    %357 = vmin.xlane.f32.xlu0 %v356
    %v358 = vpop.xlane.xlu0 %357
    %vm359 = vcmp.eq.f32.partialorder %v356, %v358
    %v360 = vsel %vm359, %v355, inf
    %361 = vmin.xlane.f32.xlu0 %v360
    %v362 = vpop.xlane.xlu0 %361
    %v363 = vcvt.f32.s32 %v362
    %v364 = vcvt.f32.s32 %v358
    %v365 = vshll.u32 %v364, 16
    %v366 = vadd.s32 %v365, %v363
    %v367 = vand.u32 %v234, 65535
    %v368 = vshra.s32 %v234, 16
    %v369 = vcvt.s32.f32 %v367
    %v370 = vcvt.s32.f32 %v368
    %371 = vmin.xlane.f32.xlu0 %v370
    %v372 = vpop.xlane.xlu0 %371
    %vm373 = vcmp.eq.f32.partialorder %v370, %v372
    %v374 = vsel %vm373, %v369, inf
    %375 = vmin.xlane.f32.xlu0 %v374
    %v376 = vpop.xlane.xlu0 %375
    %v377 = vcvt.f32.s32 %v376
    %v378 = vcvt.f32.s32 %v372
    %v379 = vshll.u32 %v378, 16
    %v380 = vadd.s32 %v379, %v377
    %v381 = vand.u32 %v235, 65535
    %v382 = vshra.s32 %v235, 16
    %v383 = vcvt.s32.f32 %v381
    %v384 = vcvt.s32.f32 %v382
    %385 = vmin.xlane.f32.xlu0 %v384
    %v386 = vpop.xlane.xlu0 %385
    %vm387 = vcmp.eq.f32.partialorder %v384, %v386
    %v388 = vsel %vm387, %v383, inf
    %389 = vmin.xlane.f32.xlu0 %v388
    %v390 = vpop.xlane.xlu0 %389
    %v391 = vcvt.f32.s32 %v390
    %v392 = vcvt.f32.s32 %v386
    %v393 = vshll.u32 %v392, 16
    %v394 = vadd.s32 %v393, %v391
    %v395 = vand.u32 %v236, 65535
    %v396 = vshra.s32 %v236, 16
    %v397 = vcvt.s32.f32 %v395
    %v398 = vcvt.s32.f32 %v396
    %399 = vmin.xlane.f32.xlu0 %v398
    %v400 = vpop.xlane.xlu0 %399
    %vm401 = vcmp.eq.f32.partialorder %v398, %v400
    %v402 = vsel %vm401, %v397, inf
    %403 = vmin.xlane.f32.xlu0 %v402
    %v404 = vpop.xlane.xlu0 %403
    %v405 = vcvt.f32.s32 %v404
    %v406 = vcvt.f32.s32 %v400
    %v407 = vshll.u32 %v406, 16
    %v408 = vadd.s32 %v407, %v405
    %v409 = vand.u32 %v237, 65535
    %v410 = vshra.s32 %v237, 16
    %v411 = vcvt.s32.f32 %v409
    %v412 = vcvt.s32.f32 %v410
    %413 = vmin.xlane.f32.xlu0 %v412
    %v414 = vpop.xlane.xlu0 %413
    %vm415 = vcmp.eq.f32.partialorder %v412, %v414
    %v416 = vsel %vm415, %v411, inf
    %417 = vmin.xlane.f32.xlu0 %v416
    %v418 = vpop.xlane.xlu0 %417
    %v419 = vcvt.f32.s32 %v418
    %v420 = vcvt.f32.s32 %v414
    %v421 = vshll.u32 %v420, 16
    %v422 = vadd.s32 %v421, %v419
    %v423 = vand.u32 %v238, 65535
    %v424 = vshra.s32 %v238, 16
    %v425 = vcvt.s32.f32 %v423
    %v426 = vcvt.s32.f32 %v424
    %427 = vmin.xlane.f32.xlu0 %v426
    %v428 = vpop.xlane.xlu0 %427
    %vm429 = vcmp.eq.f32.partialorder %v426, %v428
    %v430 = vsel %vm429, %v425, inf
    %431 = vmin.xlane.f32.xlu0 %v430
    %v432 = vpop.xlane.xlu0 %431
    %v433 = vcvt.f32.s32 %v432
    %v434 = vcvt.f32.s32 %v428
    %v435 = vshll.u32 %v434, 16
    %v436 = vadd.s32 %v435, %v433
    %v437 = vand.u32 %v239, 65535
    %v438 = vshra.s32 %v239, 16
    %v439 = vcvt.s32.f32 %v437
    %v440 = vcvt.s32.f32 %v438
    %441 = vmin.xlane.f32.xlu0 %v440
    %v442 = vpop.xlane.xlu0 %441
    %vm443 = vcmp.eq.f32.partialorder %v440, %v442
    %v444 = vsel %vm443, %v439, inf
    %445 = vmin.xlane.f32.xlu0 %v444
    %v446 = vpop.xlane.xlu0 %445
    %v447 = vcvt.f32.s32 %v446
    %v448 = vcvt.f32.s32 %v442
    %v449 = vshll.u32 %v448, 16
    %v450 = vadd.s32 %v449, %v447
    %v451 = vand.u32 %v240, 65535
    %v452 = vshra.s32 %v240, 16
    %v453 = vcvt.s32.f32 %v451
    %v454 = vcvt.s32.f32 %v452
    %455 = vmin.xlane.f32.xlu0 %v454
    %v456 = vpop.xlane.xlu0 %455
    %vm457 = vcmp.eq.f32.partialorder %v454, %v456
    %v458 = vsel %vm457, %v453, inf
    %459 = vmin.xlane.f32.xlu0 %v458
    %v460 = vpop.xlane.xlu0 %459
    %v461 = vcvt.f32.s32 %v460
    %v462 = vcvt.f32.s32 %v456
    %v463 = vshll.u32 %v462, 16
    %v464 = vadd.s32 %v463, %v461
    %vm465 = vcmp.eq.s32.totalorder %v176, %v254
    %vm466 = vcmp.eq.s32.totalorder %v176, %v268
    %vm467 = vcmp.eq.s32.totalorder %v176, %v282
    %vm468 = vcmp.eq.s32.totalorder %v176, %v296
    %vm469 = vcmp.eq.s32.totalorder %v176, %v310
    %vm470 = vcmp.eq.s32.totalorder %v176, %v324
    %vm471 = vcmp.eq.s32.totalorder %v176, %v338
    %vm472 = vcmp.eq.s32.totalorder %v176, %v352
    %vm473 = vcmp.eq.s32.totalorder %v176, %v366
    %vm474 = vcmp.eq.s32.totalorder %v176, %v380
    %vm475 = vcmp.eq.s32.totalorder %v176, %v394
    %vm476 = vcmp.eq.s32.totalorder %v176, %v408
    %vm477 = vcmp.eq.s32.totalorder %v176, %v422
    %vm478 = vcmp.eq.s32.totalorder %v176, %v436
    %vm479 = vcmp.eq.s32.totalorder %v176, %v450
    %vm480 = vcmp.eq.s32.totalorder %v176, %v464
    %v481 = vsel %vm465, 1, 0
    %v482 = vsel %vm466, 1, 0
    %v483 = vsel %vm467, 1, 0
    %v484 = vsel %vm468, 1, 0
    %v485 = vsel %vm469, 1, 0
    %v486 = vsel %vm470, 1, 0
    %v487 = vsel %vm471, 1, 0
    %v488 = vsel %vm472, 1, 0
    %v489 = vsel %vm473, 1, 0
    %v490 = vsel %vm474, 1, 0
    %v491 = vsel %vm475, 1, 0
    %v492 = vsel %vm476, 1, 0
    %v493 = vsel %vm477, 1, 0
    %v494 = vsel %vm478, 1, 0
    %v495 = vsel %vm479, 1, 0
    %v496 = vsel %vm480, 1, 0
    %v497 = vcvt.s32.f32 %v481
    %v498 = vcvt.s32.f32 %v482
    %v499 = vcvt.s32.f32 %v483
    %v500 = vcvt.s32.f32 %v484
    %v501 = vcvt.s32.f32 %v485
    %v502 = vcvt.s32.f32 %v486
    %v503 = vcvt.s32.f32 %v487
    %v504 = vcvt.s32.f32 %v488
    %v505 = vcvt.s32.f32 %v489
    %v506 = vcvt.s32.f32 %v490
    %v507 = vcvt.s32.f32 %v491
    %v508 = vcvt.s32.f32 %v492
    %v509 = vcvt.s32.f32 %v493
    %v510 = vcvt.s32.f32 %v494
    %v511 = vcvt.s32.f32 %v495
    %v512 = vcvt.s32.f32 %v496
    %v513 = vld [vmem:[%s2] sm:$0xff]
    %v514 = vld [vmem:[%s2 + $0x8] sm:$0xff]
    %v515 = vld [vmem:[%s2 + $0x10] sm:$0xff]
    %v516 = vld [vmem:[%s2 + $0x18] sm:$0xff]
    %v517 = vld [vmem:[%s2 + $0x20] sm:$0xff]
    %v518 = vld [vmem:[%s2 + $0x28] sm:$0xff]
    %v519 = vld [vmem:[%s2 + $0x30] sm:$0xff]
    %v520 = vld [vmem:[%s2 + $0x38] sm:$0xff]
    %v521 = vld [vmem:[%s2 + $0x40] sm:$0xff]
    %v522 = vld [vmem:[%s2 + $0x48] sm:$0xff]
    %v523 = vld [vmem:[%s2 + $0x50] sm:$0xff]
    %v524 = vld [vmem:[%s2 + $0x58] sm:$0xff]
    %v525 = vld [vmem:[%s2 + $0x60] sm:$0xff]
    %v526 = vld [vmem:[%s2 + $0x68] sm:$0xff]
    %v527 = vld [vmem:[%s2 + $0x70] sm:$0xff]
    %v528 = vld [vmem:[%s2 + $0x78] sm:$0xff]
    %529 = vmatpush.msra.mxu0 %v528
    %530 = vmatpush.msra.mxu0 %v527
    %531 = vmatpush.msra.mxu0 %v526
    %532 = vmatpush.msra.mxu0 %v525
    %533 = vmatpush.msra.mxu0 %v524
    %534 = vmatpush.msra.mxu0 %v523
    %535 = vmatpush.msra.mxu0 %v522
    %536 = vmatpush.msra.mxu0 %v521
    %537 = vmatpush.msra.mxu0 %v520
    %538 = vmatpush.msra.mxu0 %v519
    %539 = vmatpush.msra.mxu0 %v518
    %540 = vmatpush.msra.mxu0 %v517
    %541 = vmatpush.msra.mxu0 %v516
    %542 = vmatpush.msra.mxu0 %v515
    %543 = vmatpush.msra.mxu0 %v514
    %544 = vmatpush.msra.mxu0 %v513
    %545 = vmatmul.f32.gmra.mxu0 %v497
    %v546 = vpop.f32.mrf.mxu0
    %v547 = vadd.f32 0.0, %v546
    %548 = vmatmul.f32.gmra.mxu0 %v498
    %v549 = vpop.f32.mrf.mxu0
    %v550 = vadd.f32 0.0, %v549
    %551 = vmatmul.f32.gmra.mxu0 %v499
    %v552 = vpop.f32.mrf.mxu0
    %v553 = vadd.f32 0.0, %v552
    %554 = vmatmul.f32.gmra.mxu0 %v500
    %v555 = vpop.f32.mrf.mxu0
    %v556 = vadd.f32 0.0, %v555
    %557 = vmatmul.f32.gmra.mxu0 %v501
    %v558 = vpop.f32.mrf.mxu0
    %v559 = vadd.f32 0.0, %v558
    %560 = vmatmul.f32.gmra.mxu0 %v502
    %v561 = vpop.f32.mrf.mxu0
    %v562 = vadd.f32 0.0, %v561
    %563 = vmatmul.f32.gmra.mxu0 %v503
    %v564 = vpop.f32.mrf.mxu0
    %v565 = vadd.f32 0.0, %v564
    %566 = vmatmul.f32.gmra.mxu0 %v504
    %v567 = vpop.f32.mrf.mxu0
    %v568 = vadd.f32 0.0, %v567
    %569 = vmatmul.f32.gmra.mxu0 %v505
    %v570 = vpop.f32.mrf.mxu0
    %v571 = vadd.f32 0.0, %v570
    %572 = vmatmul.f32.gmra.mxu0 %v506
    %v573 = vpop.f32.mrf.mxu0
    %v574 = vadd.f32 0.0, %v573
    %575 = vmatmul.f32.gmra.mxu0 %v507
    %v576 = vpop.f32.mrf.mxu0
    %v577 = vadd.f32 0.0, %v576
    %578 = vmatmul.f32.gmra.mxu0 %v508
    %v579 = vpop.f32.mrf.mxu0
    %v580 = vadd.f32 0.0, %v579
    %581 = vmatmul.f32.gmra.mxu0 %v509
    %v582 = vpop.f32.mrf.mxu0
    %v583 = vadd.f32 0.0, %v582
    %584 = vmatmul.f32.gmra.mxu0 %v510
    %v585 = vpop.f32.mrf.mxu0
    %v586 = vadd.f32 0.0, %v585
    %587 = vmatmul.f32.gmra.mxu0 %v511
    %v588 = vpop.f32.mrf.mxu0
    %v589 = vadd.f32 0.0, %v588
    %590 = vmatmul.f32.gmra.mxu0 %v512
    %v591 = vpop.f32.mrf.mxu0
    %v592 = vadd.f32 0.0, %v591
    %593 = vdwg.mxu0
    %v594 = vsub.f32 %v547, %v25
    %v595 = vsub.f32 %v550, %v26
    %v596 = vsub.f32 %v553, %v27
    %v597 = vsub.f32 %v556, %v28
    %v598 = vsub.f32 %v559, %v29
    %v599 = vsub.f32 %v562, %v30
    %v600 = vsub.f32 %v565, %v31
    %v601 = vsub.f32 %v568, %v32
    %v602 = vsub.f32 %v571, %v33
    %v603 = vsub.f32 %v574, %v34
    %v604 = vsub.f32 %v577, %v35
    %v605 = vsub.f32 %v580, %v36
    %v606 = vsub.f32 %v583, %v37
    %v607 = vsub.f32 %v586, %v38
    %v608 = vsub.f32 %v589, %v39
    %v609 = vsub.f32 %v592, %v40
    %v610 = vmul.f32 %v594, %v594
    %v611 = vmul.f32 %v595, %v595
    %v612 = vmul.f32 %v596, %v596
    %v613 = vmul.f32 %v597, %v597
    %v614 = vmul.f32 %v598, %v598
    %v615 = vmul.f32 %v599, %v599
    %v616 = vmul.f32 %v600, %v600
    %v617 = vmul.f32 %v601, %v601
    %v618 = vmul.f32 %v602, %v602
    %v619 = vmul.f32 %v603, %v603
    %v620 = vmul.f32 %v604, %v604
    %v621 = vmul.f32 %v605, %v605
    %v622 = vmul.f32 %v606, %v606
    %v623 = vmul.f32 %v607, %v607
    %v624 = vmul.f32 %v608, %v608
    %v625 = vmul.f32 %v609, %v609
    %626 = vst.msk [vmem:[#allocation2] sm:$0xff] %vm65, %v547
    %627 = vst.msk [vmem:[#allocation2 + $0x8] sm:$0xff] %vm65, %v550
    %628 = vst.msk [vmem:[#allocation2 + $0x10] sm:$0xff] %vm65, %v553
    %629 = vst.msk [vmem:[#allocation2 + $0x18] sm:$0xff] %vm65, %v556
    %630 = vst.msk [vmem:[#allocation2 + $0x20] sm:$0xff] %vm65, %v559
    %631 = vst.msk [vmem:[#allocation2 + $0x28] sm:$0xff] %vm65, %v562
    %632 = vst.msk [vmem:[#allocation2 + $0x30] sm:$0xff] %vm65, %v565
    %633 = vst.msk [vmem:[#allocation2 + $0x38] sm:$0xff] %vm65, %v568
    %634 = vst.msk [vmem:[#allocation2 + $0x40] sm:$0xff] %vm65, %v571
    %635 = vst.msk [vmem:[#allocation2 + $0x48] sm:$0xff] %vm65, %v574
    %636 = vst.msk [vmem:[#allocation2 + $0x50] sm:$0xff] %vm65, %v577
    %637 = vst.msk [vmem:[#allocation2 + $0x58] sm:$0xff] %vm65, %v580
    %638 = vst.msk [vmem:[#allocation2 + $0x60] sm:$0xff] %vm65, %v583
    %639 = vst.msk [vmem:[#allocation2 + $0x68] sm:$0xff] %vm65, %v586
    %640 = vst.msk [vmem:[#allocation2 + $0x70] sm:$0xff] %vm65, %v589
    %641 = vst.msk [vmem:[#allocation2 + $0x78] sm:$0xff] %vm65, %v592
    %642 = vst.msk [vmem:[#allocation4] sm:$0xff] %vm65, %v610
    %643 = vst.msk [vmem:[#allocation4 + $0x8] sm:$0xff] %vm65, %v611
    %644 = vst.msk [vmem:[#allocation4 + $0x10] sm:$0xff] %vm65, %v612
    %645 = vst.msk [vmem:[#allocation4 + $0x18] sm:$0xff] %vm65, %v613
    %646 = vst.msk [vmem:[#allocation4 + $0x20] sm:$0xff] %vm65, %v614
    %647 = vst.msk [vmem:[#allocation4 + $0x28] sm:$0xff] %vm65, %v615
    %648 = vst.msk [vmem:[#allocation4 + $0x30] sm:$0xff] %vm65, %v616
    %649 = vst.msk [vmem:[#allocation4 + $0x38] sm:$0xff] %vm65, %v617
    %650 = vst.msk [vmem:[#allocation4 + $0x40] sm:$0xff] %vm65, %v618
    %651 = vst.msk [vmem:[#allocation4 + $0x48] sm:$0xff] %vm65, %v619
    %652 = vst.msk [vmem:[#allocation4 + $0x50] sm:$0xff] %vm65, %v620
    %653 = vst.msk [vmem:[#allocation4 + $0x58] sm:$0xff] %vm65, %v621
    %654 = vst.msk [vmem:[#allocation4 + $0x60] sm:$0xff] %vm65, %v622
    %655 = vst.msk [vmem:[#allocation4 + $0x68] sm:$0xff] %vm65, %v623
    %656 = vst.msk [vmem:[#allocation4 + $0x70] sm:$0xff] %vm65, %v624
    %657 = vst.msk [vmem:[#allocation4 + $0x78] sm:$0xff] %vm65, %v625
    %v658 = vcvt.s32.f32 %v254
    %v659 = vcvt.s32.f32 %v268
    %v660 = vcvt.s32.f32 %v282
    %v661 = vcvt.s32.f32 %v296
    %v662 = vcvt.s32.f32 %v310
    %v663 = vcvt.s32.f32 %v324
    %v664 = vcvt.s32.f32 %v338
    %v665 = vcvt.s32.f32 %v352
    %v666 = vcvt.s32.f32 %v366
    %v667 = vcvt.s32.f32 %v380
    %v668 = vcvt.s32.f32 %v394
    %v669 = vcvt.s32.f32 %v408
    %v670 = vcvt.s32.f32 %v422
    %v671 = vcvt.s32.f32 %v436
    %v672 = vcvt.s32.f32 %v450
    %v673 = vcvt.s32.f32 %v464
    %674 = vxpose.xlu0.b32.start [1/16] %v658, 128
    %675 = vxpose.xlu0.b32.cont [2/16] %v659, 128
    %676 = vxpose.xlu0.b32.cont [3/16] %v660, 128
    %677 = vxpose.xlu0.b32.cont [4/16] %v661, 128
    %678 = vxpose.xlu0.b32.cont [5/16] %v662, 128
    %679 = vxpose.xlu0.b32.cont [6/16] %v663, 128
    %680 = vxpose.xlu0.b32.cont [7/16] %v664, 128
    %681 = vxpose.xlu0.b32.cont [8/16] %v665, 128
    %682 = vxpose.xlu0.b32.cont [9/16] %v666, 128
    %683 = vxpose.xlu0.b32.cont [10/16] %v667, 128
    %684 = vxpose.xlu0.b32.cont [11/16] %v668, 128
    %685 = vxpose.xlu0.b32.cont [12/16] %v669, 128
    %686 = vxpose.xlu0.b32.cont [13/16] %v670, 128
    %687 = vxpose.xlu0.b32.cont [14/16] %v671, 128
    %688 = vxpose.xlu0.b32.cont [15/16] %v672, 128
    %689 = vxpose.xlu0.b32.end [16/16] %v673, 128
    %v690 = vpop.trf.xlu0
    %v691 = vpop.trf.xlu0
    %v692 = vpop.trf.xlu0
    %v693 = vpop.trf.xlu0
    %v694 = vpop.trf.xlu0
    %v695 = vpop.trf.xlu0
    %v696 = vpop.trf.xlu0
    %v697 = vpop.trf.xlu0
    %v698 = vpop.trf.xlu0
    %v699 = vpop.trf.xlu0
    %v700 = vpop.trf.xlu0
    %v701 = vpop.trf.xlu0
    %v702 = vpop.trf.xlu0
    %v703 = vpop.trf.xlu0
    %v704 = vpop.trf.xlu0
    %v705 = vpop.trf.xlu0
    %v706 = vcvt.f32.s32.to.zero.pseudo %v690
    %707 = vst [vmem:[#allocation6] sm:$0x1] %v706
    %p708 = scmp.eq.s32.totalorder 0, 0
    // Predicated region
    $region18: #{tpu_custom_call.1} parent=1 // pred_check
      %p709 = pneg %p708
    $region19: #{tpu_custom_call.1} parent=1 // pred_check_branch
      %711 = sbr.rel (%p709) target = $region21
    $region20: #{tpu_custom_call.1} parent=1 // pred_region
      %v712 = vlaneseq
      %v713 = vshrl.u32 %v712, 7
      %v714 = vadd.s32 %v713, 8
      %v715 = vadd.s32 %v713, 16
      %v716 = vadd.s32 %v713, 24
      %v717 = vadd.s32 %v713, 32
      %v718 = vadd.s32 %v713, 40
      %v719 = vadd.s32 %v713, 48
      %v720 = vadd.s32 %v713, 56
      %v721 = vadd.s32 %v713, 64
      %v722 = vadd.s32 %v713, 72
      %v723 = vadd.s32 %v713, 80
      %v724 = vadd.s32 %v713, 88
      %v725 = vadd.s32 %v713, 96
      %v726 = vadd.s32 %v713, 104
      %v727 = vadd.s32 %v713, 112
      %v728 = vadd.s32 %v713, 120
      %s729 = smul.u32 0, 128
      %v730 = vstv %s729
      %v731 = vadd.s32 %v713, %v730
      %v732 = vadd.s32 %v714, %v730
      %v733 = vadd.s32 %v715, %v730
      %v734 = vadd.s32 %v716, %v730
      %v735 = vadd.s32 %v717, %v730
      %v736 = vadd.s32 %v718, %v730
      %v737 = vadd.s32 %v719, %v730
      %v738 = vadd.s32 %v720, %v730
      %v739 = vadd.s32 %v721, %v730
      %v740 = vadd.s32 %v722, %v730
      %v741 = vadd.s32 %v723, %v730
      %v742 = vadd.s32 %v724, %v730
      %v743 = vadd.s32 %v725, %v730
      %v744 = vadd.s32 %v726, %v730
      %v745 = vadd.s32 %v727, %v730
      %v746 = vadd.s32 %v728, %v730
      %vm747 = vcmp.lt.s32.totalorder %v731, 16
      %vm748 = vcmp.lt.s32.totalorder %v732, 16
      %vm749 = vcmp.lt.s32.totalorder %v733, 16
      %vm750 = vcmp.lt.s32.totalorder %v734, 16
      %vm751 = vcmp.lt.s32.totalorder %v735, 16
      %vm752 = vcmp.lt.s32.totalorder %v736, 16
      %vm753 = vcmp.lt.s32.totalorder %v737, 16
      %vm754 = vcmp.lt.s32.totalorder %v738, 16
      %vm755 = vcmp.lt.s32.totalorder %v739, 16
      %vm756 = vcmp.lt.s32.totalorder %v740, 16
      %vm757 = vcmp.lt.s32.totalorder %v741, 16
      %vm758 = vcmp.lt.s32.totalorder %v742, 16
      %vm759 = vcmp.lt.s32.totalorder %v743, 16
      %vm760 = vcmp.lt.s32.totalorder %v744, 16
      %vm761 = vcmp.lt.s32.totalorder %v745, 16
      %vm762 = vcmp.lt.s32.totalorder %v746, 16
      %v763 = vsel %vm747, 1, 0
      %v764 = vsel %vm748, 1, 0
      %v765 = vsel %vm749, 1, 0
      %v766 = vsel %vm750, 1, 0
      %v767 = vsel %vm751, 1, 0
      %v768 = vsel %vm752, 1, 0
      %v769 = vsel %vm753, 1, 0
      %v770 = vsel %vm754, 1, 0
      %v771 = vsel %vm755, 1, 0
      %v772 = vsel %vm756, 1, 0
      %v773 = vsel %vm757, 1, 0
      %v774 = vsel %vm758, 1, 0
      %v775 = vsel %vm759, 1, 0
      %v776 = vsel %vm760, 1, 0
      %v777 = vsel %vm761, 1, 0
      %v778 = vsel %vm762, 1, 0
      %vm779 = vcmp.eq.s32.totalorder %v763, 1
      %vm780 = vcmp.eq.s32.totalorder %v764, 1
      %vm781 = vcmp.eq.s32.totalorder %v765, 1
      %vm782 = vcmp.eq.s32.totalorder %v766, 1
      %vm783 = vcmp.eq.s32.totalorder %v767, 1
      %vm784 = vcmp.eq.s32.totalorder %v768, 1
      %vm785 = vcmp.eq.s32.totalorder %v769, 1
      %vm786 = vcmp.eq.s32.totalorder %v770, 1
      %vm787 = vcmp.eq.s32.totalorder %v771, 1
      %vm788 = vcmp.eq.s32.totalorder %v772, 1
      %vm789 = vcmp.eq.s32.totalorder %v773, 1
      %vm790 = vcmp.eq.s32.totalorder %v774, 1
      %vm791 = vcmp.eq.s32.totalorder %v775, 1
      %vm792 = vcmp.eq.s32.totalorder %v776, 1
      %vm793 = vcmp.eq.s32.totalorder %v777, 1
      %vm794 = vcmp.eq.s32.totalorder %v778, 1
      %v795 = vsel %vm779, %v497, 0.0
      %v796 = vsel %vm780, %v498, 0.0
      %v797 = vsel %vm781, %v499, 0.0
      %v798 = vsel %vm782, %v500, 0.0
      %v799 = vsel %vm783, %v501, 0.0
      %v800 = vsel %vm784, %v502, 0.0
      %v801 = vsel %vm785, %v503, 0.0
      %v802 = vsel %vm786, %v504, 0.0
      %v803 = vsel %vm787, %v505, 0.0
      %v804 = vsel %vm788, %v506, 0.0
      %v805 = vsel %vm789, %v507, 0.0
      %v806 = vsel %vm790, %v508, 0.0
      %v807 = vsel %vm791, %v509, 0.0
      %v808 = vsel %vm792, %v510, 0.0
      %v809 = vsel %vm793, %v511, 0.0
      %v810 = vsel %vm794, %v512, 0.0
      %v811 = vadd.f32 %v795, %v796
      %v812 = vadd.f32 %v811, %v797
      %v813 = vadd.f32 %v812, %v798
      %v814 = vadd.f32 %v813, %v799
      %v815 = vadd.f32 %v814, %v800
      %v816 = vadd.f32 %v815, %v801
      %v817 = vadd.f32 %v816, %v802
      %v818 = vadd.f32 %v817, %v803
      %v819 = vadd.f32 %v818, %v804
      %v820 = vadd.f32 %v819, %v805
      %v821 = vadd.f32 %v820, %v806
      %v822 = vadd.f32 %v821, %v807
      %v823 = vadd.f32 %v822, %v808
      %v824 = vadd.f32 %v823, %v809
      %v825 = vadd.f32 %v824, %v810
      %v826 = vrot.slane %v825, 4
      %v827 = vadd.f32 %v825, %v826
      %v828 = vrot.slane %v827, 2
      %v829 = vadd.f32 %v827, %v828
      %v830 = vrot.slane %v829, 1
      %v831 = vadd.f32 %v829, %v830
      %832 = vst [vmem:[#allocation7] sm:$0x1] %v831
    $region21: #{tpu_custom_call.1} parent=1 // pred_fallthru
      _
    %p833 = scmp.ne.s32.totalorder 0, 0
    // Predicated region
    $region22: #{tpu_custom_call.1} parent=1 // pred_check
      %p834 = pneg %p833
    $region23: #{tpu_custom_call.1} parent=1 // pred_check_branch
      %836 = sbr.rel (%p834) target = $region25
    $region24: #{tpu_custom_call.1} parent=1 // pred_region
      %v837 = vadd.f32 %v497, %v498
      %v838 = vadd.f32 %v837, %v499
      %v839 = vadd.f32 %v838, %v500
      %v840 = vadd.f32 %v839, %v501
      %v841 = vadd.f32 %v840, %v502
      %v842 = vadd.f32 %v841, %v503
      %v843 = vadd.f32 %v842, %v504
      %v844 = vadd.f32 %v843, %v505
      %v845 = vadd.f32 %v844, %v506
      %v846 = vadd.f32 %v845, %v507
      %v847 = vadd.f32 %v846, %v508
      %v848 = vadd.f32 %v847, %v509
      %v849 = vadd.f32 %v848, %v510
      %v850 = vadd.f32 %v849, %v511
      %v851 = vadd.f32 %v850, %v512
      %v852 = vrot.slane %v851, 4
      %v853 = vadd.f32 %v851, %v852
      %v854 = vrot.slane %v853, 2
      %v855 = vadd.f32 %v853, %v854
      %v856 = vrot.slane %v855, 1
      %v857 = vadd.f32 %v855, %v856
      %858 = vst [vmem:[#allocation7] sm:$0x1] %v857
    $region25: #{tpu_custom_call.1} parent=1 // pred_fallthru
      _
    // Predicated region
    $region26: #{tpu_custom_call.1} parent=1 // pred_check
      _
    $region27: #{tpu_custom_call.1} parent=1 // pred_check_branch
      %860 = sbr.rel (0) target = $region29
    $region28: #{tpu_custom_call.1} parent=1 // pred_region
      %862 = vsyncadd [#allocation3], 1792
      %s863 = sshll.u32 [#allocation2], 4
      %s864 = int_to_ptr.vmem [resolvable:$true] %s863
      %s865 = sshll.u32 %s4, 4
      %s866 = int_to_ptr.hbm [resolvable:$true] %s865
      %871 = dma.vmem_to_hbm [thread:$0]  %s864, 256, %s866, [#allocation3], 128, 128, 8
    $region29: #{tpu_custom_call.1} parent=1 // pred_fallthru
      _
    // Predicated region
    $region30: #{tpu_custom_call.1} parent=1 // pred_check
      _
    $region31: #{tpu_custom_call.1} parent=1 // pred_check_branch
      %873 = sbr.rel (0) target = $region33
    $region32: #{tpu_custom_call.1} parent=1 // pred_region
      %875 = vsyncadd [#allocation5], 1792
      %s876 = sshll.u32 [#allocation4], 4
      %s877 = int_to_ptr.vmem [resolvable:$true] %s876
      %s878 = sshll.u32 %s5, 4
      %s879 = int_to_ptr.hbm [resolvable:$true] %s878
      %884 = dma.vmem_to_hbm [thread:$0]  %s877, 256, %s879, [#allocation5], 128, 128, 8
    $region33: #{tpu_custom_call.1} parent=1 // pred_fallthru
      _
    // Predicated region
    $region34: #{tpu_custom_call.1} parent=1 // pred_check
      _
    $region35: #{tpu_custom_call.1} parent=1 // pred_check_branch
      %886 = sbr.rel (0) target = $region37
    $region36: #{tpu_custom_call.1} parent=1 // pred_region
      %888 = vsyncadd [#allocation5], 0
      %s890 = sshll.u32 [#allocation6], 4
      %s891 = int_to_ptr.vmem [resolvable:$true] %s890
      %s892 = sshll.u32 %s6, 4
      %s893 = int_to_ptr.hbm [resolvable:$true] %s892
      %895 = dma.vmem_to_hbm [thread:$0]  %s891, 16, %s893, [#allocation5]
    $region37: #{tpu_custom_call.1} parent=1 // pred_fallthru
      _
    // Predicated region
    $region38: #{tpu_custom_call.1} parent=1 // pred_check
      _
    $region39: #{tpu_custom_call.1} parent=1 // pred_check_branch
      %897 = sbr.rel (0) target = $region41
    $region40: #{tpu_custom_call.1} parent=1 // pred_region
      %899 = vsyncadd [#allocation8], 0
      %s901 = sshll.u32 [#allocation7], 4
      %s902 = int_to_ptr.vmem [resolvable:$true] %s901
      %s903 = sshll.u32 %s7, 4
      %s904 = int_to_ptr.hbm [resolvable:$true] %s903
      %906 = dma.vmem_to_hbm [thread:$0]  %s902, 16, %s904, [#allocation8]
    $region41: #{tpu_custom_call.1} parent=1 // pred_fallthru
      _
    // Predicated region
    $region42: #{tpu_custom_call.1} parent=1 // pred_check
      _
    $region43: #{tpu_custom_call.1} parent=1 // pred_check_branch
      %908 = sbr.rel (0) target = $region45
    $region44: #{tpu_custom_call.1} parent=1 // pred_region
      %910 = dma.done [#allocation3], 2048
    $region45: #{tpu_custom_call.1} parent=1 // pred_fallthru
      _
    // Predicated region
    $region46: #{tpu_custom_call.1} parent=1 // pred_check
      _
    $region47: #{tpu_custom_call.1} parent=1 // pred_check_branch
      %912 = sbr.rel (0) target = $region49
    $region48: #{tpu_custom_call.1} parent=1 // pred_region
      %914 = dma.done [#allocation5], 2048
    $region49: #{tpu_custom_call.1} parent=1 // pred_fallthru
      _
    // Predicated region
    $region50: #{tpu_custom_call.1} parent=1 // pred_check
      _
    $region51: #{tpu_custom_call.1} parent=1 // pred_check_branch
      %916 = sbr.rel (0) target = $region53
    $region52: #{tpu_custom_call.1} parent=1 // pred_region
      %918 = dma.done [#allocation5], 16
    $region53: #{tpu_custom_call.1} parent=1 // pred_fallthru
      _
    // Predicated region
    $region54: #{tpu_custom_call.1} parent=1 // pred_check
      _
    $region55: #{tpu_custom_call.1} parent=1 // pred_check_branch
      %920 = sbr.rel (0) target = $region57
    $region56: #{tpu_custom_call.1} parent=1 // pred_region
      %922 = dma.done [#allocation8], 16
    $region57: #{tpu_custom_call.1} parent=1 // pred_fallthru
      _
    %923 = vsyncpa [#allocation3], 1
    %924 = vsyncpa [#allocation5], 1
    %925 = vsyncpa [#allocation8], 1

</llo_original>
